<compile_context>
chip_gen: v7x
topology: tpu7x:2x2x1
jax: 0.10.0
libtpu: 0.0.40
codegen_flags: <defaults>
</compile_context>

<pallas_src>
import jax
import jax.numpy as jnp
from jax.experimental import pallas as pl
from jax.experimental.pallas import tpu as pltpu


# ----------------------------------------------------------------------------
# helpers
# ----------------------------------------------------------------------------
def _round_up(x, m):
    return (x + m - 1) // m * m


def _pad_gate_cols(w, H, Hp):
    """(..., 4*H) with PyTorch gate order [i,f,g,o] -> (..., 4*Hp), zero-padded
    per gate so lane alignment is preserved and numerics are exact."""
    if Hp == H:
        return w
    lead = w.shape[:-1]
    w4 = w.reshape(lead + (4, H))
    pad = [(0, 0)] * (len(lead) + 1) + [(0, Hp - H)]
    return jnp.pad(w4, pad).reshape(lead + (4 * Hp,))


# ----------------------------------------------------------------------------
# Pallas kernel: tiled Linear  (x @ W + b), lane-dense output tiles.
# Used both for the hoisted layer-0 input projection and the vocab projection.
# ----------------------------------------------------------------------------
def _linear_kernel(x_ref, w_ref, b_ref, o_ref):
    o_ref[...] = (jnp.dot(x_ref[...], w_ref[...],
                          preferred_element_type=jnp.float32)
                  + b_ref[...]).astype(o_ref.dtype)


def linear_pallas(x2d, w_t, bias, *, tn=256, tv=512):
    """x2d: (N, K); w_t: (K, V); bias: (1, V) -> (N, V) float32.

    Tiles over (N, V); V is padded to a multiple of 128 so output stores are
    unmasked lane-dense vst. K is left untiled (small here)."""
    N, K = x2d.shape
    V = w_t.shape[1]
    tn = min(tn, _round_up(N, 8))
    tv = min(tv, _round_up(V, 128))
    N_pad = _round_up(N, tn)
    V_pad = _round_up(V, tv)

    x_p = jnp.pad(x2d, ((0, N_pad - N), (0, 0)))
    w_p = jnp.pad(w_t, ((0, 0), (0, V_pad - V)))
    b_p = jnp.pad(bias, ((0, 0), (0, V_pad - V)))

    out = pl.pallas_call(
        _linear_kernel,
        out_shape=jax.ShapeDtypeStruct((N_pad, V_pad), jnp.float32),
        grid_spec=pltpu.PrefetchScalarGridSpec(
            num_scalar_prefetch=0,
            grid=(N_pad // tn, V_pad // tv),
            in_specs=[
                pl.BlockSpec((tn, K), lambda i, j: (i, 0)),
                pl.BlockSpec((K, tv), lambda i, j: (0, j)),
                pl.BlockSpec((1, tv), lambda i, j: (0, j)),
            ],
            out_specs=pl.BlockSpec((tn, tv), lambda i, j: (i, j)),
        ),
        compiler_params=pltpu.CompilerParams(
            dimension_semantics=("parallel", "parallel"),
            vmem_limit_bytes=32 * 1024 * 1024),
    )(x_p, w_p, b_p)
    return out[:N, :V]


# ----------------------------------------------------------------------------
# Pallas kernel: fused multi-layer LSTM recurrence.
# Single grid point; the whole (T+1, B, 4H) precomputed layer-0 gate sequence,
# all recurrent weights, and per-layer h/c scratch live in VMEM.  The time loop
# is fully unrolled in-kernel (T is small & static); for long sequences this
# would become a time-chunked grid with a lax.fori_loop per chunk.
# ----------------------------------------------------------------------------
def _make_lstm_stack_kernel(num_layers, seq_len, hidden_pad):
    H = hidden_pad

    def gate_update(gates, c):
        # PyTorch gate order [i,f,g,o]; H is a multiple of 128 so every slice
        # is lane-aligned (no masked lanes / XLU shuffles).  sigmoid/tanh use
        # the EUP slot; the c/h update is pure VPU.
        i = jax.nn.sigmoid(gates[:, 0 * H:1 * H])
        f = jax.nn.sigmoid(gates[:, 1 * H:2 * H])
        g = jnp.tanh(gates[:, 2 * H:3 * H])
        o = jax.nn.sigmoid(gates[:, 3 * H:4 * H])
        c_new = f * c + i * g
        h_new = o * jnp.tanh(c_new)
        return h_new, c_new

    def kernel(gin_ref, whh0_ref, w_up_ref, b_up_ref, out_ref, h_scr, c_scr):
        h_scr[...] = jnp.zeros_like(h_scr)
        c_scr[...] = jnp.zeros_like(c_scr)
        cdt = whh0_ref.dtype          # bf16 MXU operands; f32 accumulation
        B = h_scr.shape[1]

        # Hoist the upper-layer bias broadcasts out of the time loop
        # (JAX does not CSE broadcast_in_dim).
        b_bc = [jnp.broadcast_to(b_up_ref[l], (B, 4 * H))
                for l in range(num_layers - 1)]

        for t in range(seq_len):             # fully-unrolled serial recurrence
            # ---- layer 0: input projection was hoisted, one matmul per step.
            x_gates = gin_ref[t]              # (B,4H) f32 = x@W_ih0 + b0
            gates = x_gates + jnp.dot(h_scr[0].astype(cdt), whh0_ref[...],
                                      preferred_element_type=jnp.float32)
            h_new, c_new = gate_update(gates, c_scr[0])
            h_scr[0] = h_new
            c_scr[0] = c_new
            h_below = h_new

            # ---- layers >= 1: single fused matmul [h_below, h] @ [W_ih; W_hh]
            for l in range(1, num_layers):
                hcat = jnp.concatenate(
                    [h_below, h_scr[l]], axis=-1).astype(cdt)   # (B, 2H)
                gates = b_bc[l - 1] + jnp.dot(
                    hcat, w_up_ref[l - 1],
                    preferred_element_type=jnp.float32)
                h_new, c_new = gate_update(gates, c_scr[l])
                h_scr[l] = h_new
                c_scr[l] = c_new
                h_below = h_new

            # Lane-dense (B,H) row write of the final-layer hidden (bf16).
            out_ref[t] = h_below.astype(out_ref.dtype)

    return kernel


def lstm_stack_pallas(gates_in, whh0, w_up, b_up, num_layers):
    """gates_in: (T,B,4H) f32 (layer-0 input projection + bias, precomputed)
       whh0    : (H, 4H)            layer-0 recurrent weights
       w_up    : (max(L-1,1), 2H, 4H) fused [W_ih; W_hh] for layers >= 1
       b_up    : (max(L-1,1), 1, 4H)  fused biases for layers >= 1
       -> final-layer hiddens (T, B, H) bf16."""
    T, B, G = gates_in.shape
    H = G // 4
    kernel = _make_lstm_stack_kernel(num_layers, T, H)
    return pl.pallas_call(
        kernel,
        out_shape=jax.ShapeDtypeStruct((T, B, H), jnp.bfloat16),
        grid_spec=pltpu.PrefetchScalarGridSpec(
            num_scalar_prefetch=0,
            grid=(1,),
            in_specs=[
                pl.BlockSpec(gates_in.shape, lambda i: (0, 0, 0)),
                pl.BlockSpec(whh0.shape, lambda i: (0, 0)),
                pl.BlockSpec(w_up.shape, lambda i: (0, 0, 0)),
                pl.BlockSpec(b_up.shape, lambda i: (0, 0, 0)),
            ],
            out_specs=pl.BlockSpec((T, B, H), lambda i: (0, 0, 0)),
            scratch_shapes=[
                pltpu.VMEM((num_layers, B, H), jnp.float32),   # h per layer
                pltpu.VMEM((num_layers, B, H), jnp.float32),   # c per layer
            ],
        ),
        compiler_params=pltpu.CompilerParams(
            dimension_semantics=("arbitrary",),
            vmem_limit_bytes=32 * 1024 * 1024),
    )(gates_in, whh0, w_up, b_up)


# ----------------------------------------------------------------------------
# Parameter preparation: pad H -> multiple of 128 (exact zero padding), stack
# and fuse per-layer weights, cast MXU operands to bf16.
# ----------------------------------------------------------------------------
def prepare_params(params, hidden_size, num_layers, *, lane=128,
                   compute_dtype=jnp.bfloat16):
    H = hidden_size
    Hp = _round_up(H, lane)
    lstm = params["lstm"]

    def pad_hid(w):   # (H, 4H) -> (Hp, 4Hp) with zero rows/gate-cols
        return jnp.pad(_pad_gate_cols(w, H, Hp), ((0, Hp - H), (0, 0)))

    w_ih0 = _pad_gate_cols(lstm[0]["w_ih_t"], H, Hp)            # (E, 4Hp)
    b0 = _pad_gate_cols(lstm[0]["b"], H, Hp)                    # (1, 4Hp)
    whh0 = pad_hid(lstm[0]["w_hh_t"])                           # (Hp, 4Hp)
    if num_layers > 1:
        # Fused per-layer weight [W_ih ; W_hh] -> (2*Hp, 4*Hp) so the serial
        # path needs a single matmul per upper layer per step.
        w_up = jnp.stack([
            jnp.concatenate([pad_hid(l["w_ih_t"]), pad_hid(l["w_hh_t"])],
                            axis=0)
            for l in lstm[1:]])                                  # (L-1,2Hp,4Hp)
        b_up = jnp.stack([_pad_gate_cols(l["b"], H, Hp) for l in lstm[1:]])
    else:  # dummy (unused) so the kernel signature stays fixed
        w_up = jnp.zeros((1, 2 * Hp, 4 * Hp), jnp.float32)
        b_up = jnp.zeros((1, 1, 4 * Hp), jnp.float32)
    lin_w = jnp.pad(params["lin_w_t"], ((0, Hp - H), (0, 0)))   # (Hp, V)

    return {
        "embed": params["embed"],
        "w_ih0_t": w_ih0.astype(compute_dtype),
        "b0": b0.astype(jnp.float32),
        "whh0": whh0.astype(compute_dtype),
        "w_up": w_up.astype(compute_dtype),
        "b_up": b_up.astype(jnp.float32),
        "lin_w_t": lin_w.astype(compute_dtype),
        "lin_b": params["lin_b"].astype(jnp.float32),
        "num_layers": num_layers,
        "hidden_pad": Hp,
        "compute_dtype": compute_dtype,
    }


# ----------------------------------------------------------------------------
# DecoderRNN forward (Pallas path)
# ----------------------------------------------------------------------------
def decoder_rnn_forward(pp, features, captions):
    """features: (B, E) f32; captions: (T, B) int32 -> logits (T+1, B, V)."""
    cdt = pp["compute_dtype"]
    Hp = pp["hidden_pad"]
    L = pp["num_layers"]
    T, B = captions.shape
    E = pp["embed"].shape[1]
    V = pp["lin_b"].shape[1]

    # --- glue: embedding gather, dropout (identity), prepend image features.
    emb = pp["embed"][captions]                                  # (T, B, E)
    # TODO(synk): nn.Dropout(0.5) is active only in train mode and uses torch's
    # RNG; implemented here as identity (eval-mode semantics).
    seq = jnp.concatenate([features[None, :, :], emb], axis=0)   # (T+1, B, E)
    Tp1 = T + 1
    Bp = _round_up(B, 8)
    seq = jnp.pad(seq, ((0, 0), (0, Bp - B), (0, 0)))            # pad sublanes

    # --- hoisted layer-0 input projection (+ fused bias): one big MXU matmul.
    gin = linear_pallas(seq.reshape(Tp1 * Bp, E).astype(cdt),
                        pp["w_ih0_t"], pp["b0"])                 # (N, 4Hp) f32
    gin = gin.reshape(Tp1, Bp, 4 * Hp)

    # --- fused multi-layer LSTM recurrence (single pallas_call), bf16 hiddens.
    hiddens = lstm_stack_pallas(gin, pp["whh0"], pp["w_up"], pp["b_up"], L)

    # --- output Linear, tiled lane-dense over (rows, vocab).
    logits = linear_pallas(hiddens.reshape(Tp1 * Bp, Hp),
                           pp["lin_w_t"], pp["lin_b"])           # (N, V) f32
    return logits.reshape(Tp1, Bp, V)[:, :B, :]


# ----------------------------------------------------------------------------
# Pure-JAX references (for correctness check)
# ----------------------------------------------------------------------------
def _mm(a, b, cdt):
    return jnp.dot(a.astype(cdt), b.astype(cdt),
                   preferred_element_type=jnp.float32)


def _lstm_layer_ref(x, w_ih_t, w_hh_t, bias, cdt):
    B = x.shape[1]
    H = w_hh_t.shape[0]

    def step(carry, xt):
        h, c = carry
        gates = _mm(xt, w_ih_t, cdt) + _mm(h, w_hh_t, cdt) + bias[0]
        i, f, g, o = jnp.split(gates, 4, axis=-1)
        i, f, o = jax.nn.sigmoid(i), jax.nn.sigmoid(f), jax.nn.sigmoid(o)
        g = jnp.tanh(g)
        c = f * c + i * g
        h = o * jnp.tanh(c)
        return (h, c), h

    init = (jnp.zeros((B, H), jnp.float32), jnp.zeros((B, H), jnp.float32))
    _, hs = jax.lax.scan(step, init, x)
    return hs


def decoder_rnn_ref(params, features, captions, cdt):
    emb = params["embed"][captions]
    seq = jnp.concatenate([features[None, :, :], emb], axis=0)
    h = seq
    for layer in params["lstm"]:
        h = _lstm_layer_ref(h, layer["w_ih_t"], layer["w_hh_t"], layer["b"], cdt)
    return _mm(h, params["lin_w_t"], cdt) + params["lin_b"][0]


# ----------------------------------------------------------------------------
# Deterministic parameter init + driver
# ----------------------------------------------------------------------------
def init_params(key, embed_size, hidden_size, vocab_size, num_layers):
    keys = jax.random.split(key, 3 + 4 * num_layers)
    scale = 1.0 / jnp.sqrt(hidden_size)
    params = {
        "embed": jax.random.normal(keys[0], (vocab_size, embed_size),
                                   jnp.float32) * 0.1,
        "lstm": [],
        # stored pre-transposed: (H, V) and (1, V)
        "lin_w_t": (jax.random.uniform(keys[1], (hidden_size, vocab_size),
                                       jnp.float32, -1, 1) * scale),
        "lin_b": (jax.random.uniform(keys[2], (1, vocab_size),
                                     jnp.float32, -1, 1) * scale),
    }
    for l in range(num_layers):
        in_dim = embed_size if l == 0 else hidden_size
        k0, k1, k2, k3 = keys[3 + 4 * l: 3 + 4 * (l + 1)]
        params["lstm"].append({
            # pre-transposed: (E_in, 4H), (H, 4H); bias = b_ih + b_hh fused
            "w_ih_t": jax.random.uniform(k0, (in_dim, 4 * hidden_size),
                                         jnp.float32, -1, 1) * scale,
            "w_hh_t": jax.random.uniform(k1, (hidden_size, 4 * hidden_size),
                                         jnp.float32, -1, 1) * scale,
            "b": (jax.random.uniform(k2, (1, 4 * hidden_size),
                                     jnp.float32, -1, 1) * scale
                  + jax.random.uniform(k3, (1, 4 * hidden_size),
                                       jnp.float32, -1, 1) * scale),
        })
    return params


if __name__ == "__main__":
    embed_size, hidden_size, vocab_size, num_layers = 32, 32, 40, 2
    seq_len, batch = 8, 4

    key = jax.random.PRNGKey(0)
    k_param, k_feat, k_cap = jax.random.split(key, 3)

    params = init_params(k_param, embed_size, hidden_size, vocab_size,
                         num_layers)
    pparams = prepare_params(params, hidden_size, num_layers)

    features = jax.random.normal(k_feat, (batch, embed_size), jnp.float32)
    captions = jax.random.randint(k_cap, (seq_len, batch), 0, vocab_size,
                                  jnp.int32)

    out = decoder_rnn_forward(pparams, features, captions)
    out = jax.block_until_ready(out)
    assert out.shape == (seq_len + 1, batch, vocab_size), out.shape

    # Tight check vs. a reference that mirrors the bf16-operand matmuls.
    ref_bf16 = decoder_rnn_ref(params, features, captions, jnp.bfloat16)
    assert jnp.allclose(out, ref_bf16, atol=5e-3, rtol=5e-3)

    # Loose sanity check vs. the pure-f32 reference (bounds bf16 quant error).
    ref_f32 = decoder_rnn_ref(params, features, captions, jnp.float32)
    assert jnp.allclose(out, ref_f32, atol=1e-1, rtol=1e-1)

    print("KERNEL_OK")
</pallas_src>

<mosaic_0001>
module attributes {stable_mosaic.version = 11 : i64} {
  func.func @_linear_kernel(%arg0: i32, %arg1: i32, %arg2: memref<72x32xbf16, #tpu.memory_space<vmem>>, %arg3: memref<32x512xbf16, #tpu.memory_space<vmem>>, %arg4: memref<1x512xf32, #tpu.memory_space<vmem>>, %arg5: memref<72x512xf32, #tpu.memory_space<vmem>>) attributes {dimension_semantics = [#tpu.dimension_semantics<parallel>, #tpu.dimension_semantics<parallel>], iteration_bounds = array<i64: 1, 1>, scalar_prefetch = 0 : i64, scratch_operands = 0 : i64, tpu.core_type = #tpu.core_type<tc>, window_params = [{transform_indices = @transform_0, window_bounds = array<i64: 72, 32>}, {transform_indices = @transform_1, window_bounds = array<i64: 32, 512>}, {transform_indices = @transform_2, window_bounds = array<i64: 1, 512>}, {transform_indices = @transform_3, window_bounds = array<i64: 72, 512>}]} {
    %c0 = arith.constant 0 : index
    %c0_0 = arith.constant 0 : index
    %0 = vector.load %arg2[%c0, %c0_0] : memref<72x32xbf16, #tpu.memory_space<vmem>>, vector<72x32xbf16>
    %c0_1 = arith.constant 0 : index
    %c0_2 = arith.constant 0 : index
    %1 = vector.load %arg3[%c0_1, %c0_2] : memref<32x512xbf16, #tpu.memory_space<vmem>>, vector<32x512xbf16>
    %cst = arith.constant dense<0.000000e+00> : vector<72x512xf32>
    %2 = tpu.matmul %0, %1, %cst {dimension_numbers = #tpu.dot_dimension_numbers<[1], [0], [0], [1], [0, 0, 1, 1], [], []>} : vector<72x32xbf16>, vector<32x512xbf16>, vector<72x512xf32> -> vector<72x512xf32>
    %c0_3 = arith.constant 0 : index
    %c0_4 = arith.constant 0 : index
    %3 = vector.load %arg4[%c0_3, %c0_4] : memref<1x512xf32, #tpu.memory_space<vmem>>, vector<1x512xf32>
    %4 = vector.broadcast %3 : vector<1x512xf32> to vector<72x512xf32>
    %5 = arith.addf %2, %4 : vector<72x512xf32>
    %c0_5 = arith.constant 0 : index
    %c0_6 = arith.constant 0 : index
    %6 = vector.load %arg5[%c0_5, %c0_6] : memref<72x512xf32, #tpu.memory_space<vmem>>, vector<72x512xf32>
    tpu.vector_store %arg5[%c0_5, %c0_6], %5 {strides = array<i32>} : memref<72x512xf32, #tpu.memory_space<vmem>>, vector<72x512xf32>,
    return
  }
  func.func @transform_0(%arg0: i32, %arg1: i32) -> (i32, i32) {
    %c0_i32 = arith.constant 0 : i32
    %c0_i32_0 = arith.constant 0 : i32
    return %arg0, %c0_i32 : i32, i32
  }
  func.func @transform_1(%arg0: i32, %arg1: i32) -> (i32, i32) {
    %c0_i32 = arith.constant 0 : i32
    %c0_i32_0 = arith.constant 0 : i32
    return %c0_i32, %arg1 : i32, i32
  }
  func.func @transform_2(%arg0: i32, %arg1: i32) -> (i32, i32) {
    %c0_i32 = arith.constant 0 : i32
    %c0_i32_0 = arith.constant 0 : i32
    return %c0_i32, %arg1 : i32, i32
  }
  func.func @transform_3(%arg0: i32, %arg1: i32) -> (i32, i32) {
    %c0_i32 = arith.constant 0 : i32
    return %arg0, %arg1 : i32, i32
  }
}

</mosaic_0001>

<llo_original>
// kernel: tpu_custom_call.1
$region0: #{tpu_custom_call.1}
  #allocation0 [shape = 'u32[]', space=smem, size = 0x4, offset = 0x4, fixed_abs, tag = 'smem constant byte address 0x4 - core index']
  #allocation1 [shape = 'u32[144,128]{1,0:T(1,128)}', space=vmem, size = 0x12000, scoped, tag = 'internal scratch']
  %s0 = inlined_call_operand.vmem [shape: bf16[72,32], index: 0, kind: input, shape index: {}]
  %s1 = inlined_call_operand.hbm [shape: bf16[32,512], index: 1, kind: input, shape index: {}]
  %s2 = inlined_call_operand.vmem [shape: f32[1,512], index: 2, kind: input, shape index: {}]
  %s3 = inlined_call_operand.hbm [shape: f32[72,512], index: 3, kind: output, shape index: {}]
  %s4 = sld [smem:[#allocation0]]
  $region26: #{tpu_custom_call.1} parent=0
    _
  %s6 = ssub.s32 1, %s4
  %s7 = scalar_select 0, %s6, %s4
  $region1: #{tpu_custom_call.1} parent=0
    #allocation2 [shape = 'u8[32768]{0}', space=vmem, size = 0x8000, scoped, tag = 'input window, operand 1, single buffered']
    #allocation3 [shape = 's32[1]{0}', space=sflag, size = 0x4, scoped, tag = 'scoped memory for tpu_custom_call.1']
    #allocation4 [shape = 's32[1]{0}', space=sflag, size = 0x4, scoped, tag = 'scoped memory for tpu_custom_call.1']
    #allocation5 [shape = 'u8[147456]{0}', space=vmem, size = 0x24000, scoped, tag = 'output window, operand 0, single buffered']
    %8 = vsyncpa [#allocation3], 0
    %9 = vsyncpa [#allocation4], 0
    // Predicated region
    $region2: #{tpu_custom_call.1} parent=1 // pred_check
      _
    $region3: #{tpu_custom_call.1} parent=1 // pred_check_branch
      %11 = sbr.rel (0) target = $region5
    $region4: #{tpu_custom_call.1} parent=1 // pred_region
      _
    $region5: #{tpu_custom_call.1} parent=1 // pred_fallthru
      _
    // Predicated region
    $region6: #{tpu_custom_call.1} parent=1 // pred_check
      _
    $region7: #{tpu_custom_call.1} parent=1 // pred_check_branch
      %13 = sbr.rel (0) target = $region9
    $region8: #{tpu_custom_call.1} parent=1 // pred_region
      %s15 = ssub.s32 1024, 1024
      %16 = vsyncadd [#allocation3], %s15
      %s17 = sshll.u32 [#allocation2], 4
      %s18 = int_to_ptr.vmem [resolvable:$true] %s17
      %23 = dma.hbm_to_vmem [thread:$0]  %s1, 1024, %s18, [#allocation3], 256, 256, 16
    $region9: #{tpu_custom_call.1} parent=1 // pred_fallthru
      _
    // Predicated region
    $region10: #{tpu_custom_call.1} parent=1 // pred_check
      _
    $region11: #{tpu_custom_call.1} parent=1 // pred_check_branch
      %25 = sbr.rel (0) target = $region13
    $region12: #{tpu_custom_call.1} parent=1 // pred_region
      _
    $region13: #{tpu_custom_call.1} parent=1 // pred_fallthru
      _
    // Predicated region
    $region14: #{tpu_custom_call.1} parent=1 // pred_check
      _
    $region15: #{tpu_custom_call.1} parent=1 // pred_check_branch
      %27 = sbr.rel (0) target = $region17
    $region16: #{tpu_custom_call.1} parent=1 // pred_region
      %28 = dma.done [#allocation3], 1024
    $region17: #{tpu_custom_call.1} parent=1 // pred_fallthru
      _
    %v30 = vld [vmem:[%s0] sm:$0xf]
    %v31 = vld [vmem:[%s0 + $0x4] sm:$0xf]
    %v32 = vld [vmem:[%s0 + $0x8] sm:$0xf]
    %v33 = vld [vmem:[%s0 + $0xc] sm:$0xf]
    %v34 = vld [vmem:[%s0 + $0x10] sm:$0xf]
    %v35 = vld [vmem:[%s0 + $0x14] sm:$0xf]
    %v36 = vld [vmem:[%s0 + $0x18] sm:$0xf]
    %v37 = vld [vmem:[%s0 + $0x1c] sm:$0xf]
    %v38 = vld [vmem:[%s0 + $0x20] sm:$0xf]
    %v39 = vld [vmem:[#allocation2] sm:$0xff]
    %v40 = vld [vmem:[#allocation2 + $0x8] sm:$0xff]
    %v41 = vld [vmem:[#allocation2 + $0x10] sm:$0xff]
    %v42 = vld [vmem:[#allocation2 + $0x18] sm:$0xff]
    %v43 = vld [vmem:[#allocation2 + $0x20] sm:$0xff]
    %v44 = vld [vmem:[#allocation2 + $0x28] sm:$0xff]
    %v45 = vld [vmem:[#allocation2 + $0x30] sm:$0xff]
    %v46 = vld [vmem:[#allocation2 + $0x38] sm:$0xff]
    %v47 = vld [vmem:[%s2] sm:$0xf]
    %v49 = vlaneseq
    %v50 = vshrl.u32 %v49, 7
    %v51 = vsub.s32 0, %v50
    %v52 = vrot.slane %v47, %v51
    %v53 = vlaneseq
    %v54 = vshrl.u32 %v53, 7
    %v55 = vsub.s32 1, %v54
    %v56 = vrot.slane %v47, %v55
    %v57 = vlaneseq
    %v58 = vshrl.u32 %v57, 7
    %v59 = vsub.s32 2, %v58
    %v60 = vrot.slane %v47, %v59
    %v61 = vlaneseq
    %v62 = vshrl.u32 %v61, 7
    %v63 = vsub.s32 3, %v62
    %v64 = vrot.slane %v47, %v63
    %v78 = vunpack.c.l.b16 %v30
    %v79 = vunpack.c.l.b16 %v31
    %v80 = vunpack.c.l.b16 %v32
    %v81 = vunpack.c.l.b16 %v33
    %v82 = vunpack.c.l.b16 %v34
    %v83 = vunpack.c.l.b16 %v35
    %v84 = vunpack.c.l.b16 %v36
    %v85 = vunpack.c.l.b16 %v37
    %v86 = vunpack.c.l.b16 %v38
    %v87 = vpack.c.b16 %v79, %v78
    %v88 = vpack.c.b16 %v81, %v80
    %v89 = vpack.c.b16 %v83, %v82
    %v90 = vpack.c.b16 %v85, %v84
    %v91 = vpack.c.b16 %v86, %v86
    %v100 = vunpack.c.l.b16 %v39
    %v101 = vunpack.c.h.b16 %v39
    %v102 = vunpack.c.l.b16 %v40
    %v103 = vunpack.c.h.b16 %v40
    %v104 = vunpack.c.l.b16 %v41
    %v105 = vunpack.c.h.b16 %v41
    %v106 = vunpack.c.l.b16 %v42
    %v107 = vunpack.c.h.b16 %v42
    %v108 = vunpack.c.l.b16 %v43
    %v109 = vunpack.c.h.b16 %v43
    %v110 = vunpack.c.l.b16 %v44
    %v111 = vunpack.c.h.b16 %v44
    %v112 = vunpack.c.l.b16 %v45
    %v113 = vunpack.c.h.b16 %v45
    %v114 = vunpack.c.l.b16 %v46
    %v115 = vunpack.c.h.b16 %v46
    %v116 = vpack.c.b16 %v104, %v100
    %v117 = vpack.c.b16 %v105, %v101
    %v118 = vpack.c.b16 %v106, %v102
    %v119 = vpack.c.b16 %v107, %v103
    %v120 = vpack.c.b16 %v112, %v108
    %v121 = vpack.c.b16 %v113, %v109
    %v122 = vpack.c.b16 %v114, %v110
    %v123 = vpack.c.b16 %v115, %v111
    %vm132 = vcmask 261120
    %v134 = vsel %vm132, %v87, 0
    %v137 = vsel %vm132, %v88, 0
    %v140 = vsel %vm132, %v89, 0
    %v143 = vsel %vm132, %v90, 0
    %v146 = vsel %vm132, %v91, 0
    %148 = vmatprep.subr.bf16.mxu0 %v117
    %149 = vmatpush1.bf16.msra.mxu0 %v116
    %150 = vmatprep.subr.bf16.mxu0 %v121
    %151 = vmatpush1.bf16.msra.mxu0 %v120
    %152 = vmatprep.subr.bf16.mxu0 0
    %153 = vmatpush1.bf16.msra.mxu0 0
    %154 = vmatprep.subr.bf16.mxu0 0
    %155 = vmatpush1.bf16.msra.mxu0 0
    %156 = vmatprep.subr.bf16.mxu0 0
    %157 = vmatpush1.bf16.msra.mxu0 0
    %158 = vmatprep.subr.bf16.mxu0 0
    %159 = vmatpush1.bf16.msra.mxu0 0
    %160 = vmatprep.subr.bf16.mxu0 0
    %161 = vmatpush1.bf16.msra.mxu0 0
    %162 = vmatprep.subr.bf16.mxu0 0
    %163 = vmatpush1.bf16.msra.mxu0 0
    %164 = vmatprep.subr.bf16.mxu0 0
    %165 = vmatpush1.bf16.msra.mxu0 0
    %166 = vmatprep.subr.bf16.mxu0 0
    %167 = vmatpush1.bf16.msra.mxu0 0
    %168 = vmatprep.subr.bf16.mxu0 0
    %169 = vmatpush1.bf16.msra.mxu0 0
    %170 = vmatprep.subr.bf16.mxu0 0
    %171 = vmatpush1.bf16.msra.mxu0 0
    %172 = vmatprep.subr.bf16.mxu0 0
    %173 = vmatpush1.bf16.msra.mxu0 0
    %174 = vmatprep.subr.bf16.mxu0 0
    %175 = vmatpush1.bf16.msra.mxu0 0
    %176 = vmatprep.subr.bf16.mxu0 0
    %177 = vmatpush1.bf16.msra.mxu0 0
    %178 = vmatprep.subr.bf16.mxu0 0
    %179 = vmatpush1.bf16.msra.mxu0 0
    %180 = vmatprep.mubr.bf16.mxu0 0
    %181 = vmatmul.mubr.bf16.gmra.mrb[0].mxu0 %v134
    %v182 = vpop.f32.mrb[0].mxu0
    %v183 = vadd.f32 %v52, %v182
    %v184 = vpop.f32.mrb[0].mxu0
    %v185 = vadd.f32 %v56, %v184
    %v186 = vpop.f32.mrb[0].mxu0
    %v187 = vadd.f32 %v52, %v186
    %v188 = vpop.f32.mrb[0].mxu0
    %v189 = vadd.f32 %v56, %v188
    %190 = vmatprep.mubr.bf16.mxu0 0
    %191 = vmatmul.mubr.bf16.gmra.mrb[0].mxu0 %v137
    %v192 = vpop.f32.mrb[0].mxu0
    %v193 = vadd.f32 %v52, %v192
    %v194 = vpop.f32.mrb[0].mxu0
    %v195 = vadd.f32 %v56, %v194
    %v196 = vpop.f32.mrb[0].mxu0
    %v197 = vadd.f32 %v52, %v196
    %v198 = vpop.f32.mrb[0].mxu0
    %v199 = vadd.f32 %v56, %v198
    %200 = vmatprep.mubr.bf16.mxu0 0
    %201 = vmatmul.mubr.bf16.gmra.mrb[0].mxu0 %v140
    %v202 = vpop.f32.mrb[0].mxu0
    %v203 = vadd.f32 %v52, %v202
    %v204 = vpop.f32.mrb[0].mxu0
    %v205 = vadd.f32 %v56, %v204
    %v206 = vpop.f32.mrb[0].mxu0
    %v207 = vadd.f32 %v52, %v206
    %v208 = vpop.f32.mrb[0].mxu0
    %v209 = vadd.f32 %v56, %v208
    %210 = vmatprep.mubr.bf16.mxu0 0
    %211 = vmatmul.mubr.bf16.gmra.mrb[0].mxu0 %v143
    %v212 = vpop.f32.mrb[0].mxu0
    %v213 = vadd.f32 %v52, %v212
    %v214 = vpop.f32.mrb[0].mxu0
    %v215 = vadd.f32 %v56, %v214
    %v216 = vpop.f32.mrb[0].mxu0
    %v217 = vadd.f32 %v52, %v216
    %v218 = vpop.f32.mrb[0].mxu0
    %v219 = vadd.f32 %v56, %v218
    %220 = vmatprep.mubr.bf16.mxu0 0
    %221 = vmatmul.mubr.bf16.gmra.mrb[0].mxu0 %v146
    %v222 = vpop.f32.mrb[0].mxu0
    %v223 = vadd.f32 %v52, %v222
    %v224 = vpop.f32.mrb[0].mxu0
    %v225 = vadd.f32 %v56, %v224
    %v226 = vpop.f32.mrb[0].mxu0
    %v227 = vpop.f32.mrb[0].mxu0
    %228 = vdwg.mxu0
    %229 = vmatprep.subr.bf16.mxu0 %v119
    %230 = vmatpush1.bf16.msra.mxu0 %v118
    %231 = vmatprep.subr.bf16.mxu0 %v123
    %232 = vmatpush1.bf16.msra.mxu0 %v122
    %233 = vmatprep.subr.bf16.mxu0 0
    %234 = vmatpush1.bf16.msra.mxu0 0
    %235 = vmatprep.subr.bf16.mxu0 0
    %236 = vmatpush1.bf16.msra.mxu0 0
    %237 = vmatprep.subr.bf16.mxu0 0
    %238 = vmatpush1.bf16.msra.mxu0 0
    %239 = vmatprep.subr.bf16.mxu0 0
    %240 = vmatpush1.bf16.msra.mxu0 0
    %241 = vmatprep.subr.bf16.mxu0 0
    %242 = vmatpush1.bf16.msra.mxu0 0
    %243 = vmatprep.subr.bf16.mxu0 0
    %244 = vmatpush1.bf16.msra.mxu0 0
    %245 = vmatprep.subr.bf16.mxu0 0
    %246 = vmatpush1.bf16.msra.mxu0 0
    %247 = vmatprep.subr.bf16.mxu0 0
    %248 = vmatpush1.bf16.msra.mxu0 0
    %249 = vmatprep.subr.bf16.mxu0 0
    %250 = vmatpush1.bf16.msra.mxu0 0
    %251 = vmatprep.subr.bf16.mxu0 0
    %252 = vmatpush1.bf16.msra.mxu0 0
    %253 = vmatprep.subr.bf16.mxu0 0
    %254 = vmatpush1.bf16.msra.mxu0 0
    %255 = vmatprep.subr.bf16.mxu0 0
    %256 = vmatpush1.bf16.msra.mxu0 0
    %257 = vmatprep.subr.bf16.mxu0 0
    %258 = vmatpush1.bf16.msra.mxu0 0
    %259 = vmatprep.subr.bf16.mxu0 0
    %260 = vmatpush1.bf16.msra.mxu0 0
    %261 = vmatprep.mubr.bf16.mxu0 0
    %262 = vmatmul.mubr.bf16.gmra.mrb[0].mxu0 %v134
    %v263 = vpop.f32.mrb[0].mxu0
    %v264 = vadd.f32 %v60, %v263
    %v265 = vpop.f32.mrb[0].mxu0
    %v266 = vadd.f32 %v64, %v265
    %v267 = vpop.f32.mrb[0].mxu0
    %v268 = vadd.f32 %v60, %v267
    %v269 = vpop.f32.mrb[0].mxu0
    %v270 = vadd.f32 %v64, %v269
    %271 = vmatprep.mubr.bf16.mxu0 0
    %272 = vmatmul.mubr.bf16.gmra.mrb[0].mxu0 %v137
    %v273 = vpop.f32.mrb[0].mxu0
    %v274 = vadd.f32 %v60, %v273
    %v275 = vpop.f32.mrb[0].mxu0
    %v276 = vadd.f32 %v64, %v275
    %v277 = vpop.f32.mrb[0].mxu0
    %v278 = vadd.f32 %v60, %v277
    %v279 = vpop.f32.mrb[0].mxu0
    %v280 = vadd.f32 %v64, %v279
    %281 = vmatprep.mubr.bf16.mxu0 0
    %282 = vmatmul.mubr.bf16.gmra.mrb[0].mxu0 %v140
    %v283 = vpop.f32.mrb[0].mxu0
    %v284 = vadd.f32 %v60, %v283
    %v285 = vpop.f32.mrb[0].mxu0
    %v286 = vadd.f32 %v64, %v285
    %v287 = vpop.f32.mrb[0].mxu0
    %v288 = vadd.f32 %v60, %v287
    %v289 = vpop.f32.mrb[0].mxu0
    %v290 = vadd.f32 %v64, %v289
    %291 = vmatprep.mubr.bf16.mxu0 0
    %292 = vmatmul.mubr.bf16.gmra.mrb[0].mxu0 %v143
    %v293 = vpop.f32.mrb[0].mxu0
    %v294 = vadd.f32 %v60, %v293
    %v295 = vpop.f32.mrb[0].mxu0
    %v296 = vadd.f32 %v64, %v295
    %v297 = vpop.f32.mrb[0].mxu0
    %v298 = vadd.f32 %v60, %v297
    %v299 = vpop.f32.mrb[0].mxu0
    %v300 = vadd.f32 %v64, %v299
    %301 = vmatprep.mubr.bf16.mxu0 0
    %302 = vmatmul.mubr.bf16.gmra.mrb[0].mxu0 %v146
    %v303 = vpop.f32.mrb[0].mxu0
    %v304 = vadd.f32 %v60, %v303
    %v305 = vpop.f32.mrb[0].mxu0
    %v306 = vadd.f32 %v64, %v305
    %v307 = vpop.f32.mrb[0].mxu0
    %v308 = vpop.f32.mrb[0].mxu0
    %309 = vdwg.mxu0
    %310 = vst [vmem:[#allocation5] sm:$0xff] %v183
    %311 = vst [vmem:[#allocation5 + $0x8] sm:$0xff] %v185
    %312 = vst [vmem:[#allocation5 + $0x10] sm:$0xff] %v264
    %313 = vst [vmem:[#allocation5 + $0x18] sm:$0xff] %v266
    %314 = vst [vmem:[#allocation5 + $0x20] sm:$0xff] %v187
    %315 = vst [vmem:[#allocation5 + $0x28] sm:$0xff] %v189
    %316 = vst [vmem:[#allocation5 + $0x30] sm:$0xff] %v268
    %317 = vst [vmem:[#allocation5 + $0x38] sm:$0xff] %v270
    %318 = vst [vmem:[#allocation5 + $0x40] sm:$0xff] %v193
    %319 = vst [vmem:[#allocation5 + $0x48] sm:$0xff] %v195
    %320 = vst [vmem:[#allocation5 + $0x50] sm:$0xff] %v274
    %321 = vst [vmem:[#allocation5 + $0x58] sm:$0xff] %v276
    %322 = vst [vmem:[#allocation5 + $0x60] sm:$0xff] %v197
    %323 = vst [vmem:[#allocation5 + $0x68] sm:$0xff] %v199
    %324 = vst [vmem:[#allocation5 + $0x70] sm:$0xff] %v278
    %325 = vst [vmem:[#allocation5 + $0x78] sm:$0xff] %v280
    %326 = vst [vmem:[#allocation5 + $0x80] sm:$0xff] %v203
    %327 = vst [vmem:[#allocation5 + $0x88] sm:$0xff] %v205
    %328 = vst [vmem:[#allocation5 + $0x90] sm:$0xff] %v284
    %329 = vst [vmem:[#allocation5 + $0x98] sm:$0xff] %v286
    %330 = vst [vmem:[#allocation5 + $0xa0] sm:$0xff] %v207
    %331 = vst [vmem:[#allocation5 + $0xa8] sm:$0xff] %v209
    %332 = vst [vmem:[#allocation5 + $0xb0] sm:$0xff] %v288
    %333 = vst [vmem:[#allocation5 + $0xb8] sm:$0xff] %v290
    %334 = vst [vmem:[#allocation5 + $0xc0] sm:$0xff] %v213
    %335 = vst [vmem:[#allocation5 + $0xc8] sm:$0xff] %v215
    %336 = vst [vmem:[#allocation5 + $0xd0] sm:$0xff] %v294
    %337 = vst [vmem:[#allocation5 + $0xd8] sm:$0xff] %v296
    %338 = vst [vmem:[#allocation5 + $0xe0] sm:$0xff] %v217
    %339 = vst [vmem:[#allocation5 + $0xe8] sm:$0xff] %v219
    %340 = vst [vmem:[#allocation5 + $0xf0] sm:$0xff] %v298
    %341 = vst [vmem:[#allocation5 + $0xf8] sm:$0xff] %v300
    %342 = vst [vmem:[#allocation5 + $0x100] sm:$0xff] %v223
    %343 = vst [vmem:[#allocation5 + $0x108] sm:$0xff] %v225
    %344 = vst [vmem:[#allocation5 + $0x110] sm:$0xff] %v304
    %345 = vst [vmem:[#allocation5 + $0x118] sm:$0xff] %v306
    // Predicated region
    $region18: #{tpu_custom_call.1} parent=1 // pred_check
      _
    $region19: #{tpu_custom_call.1} parent=1 // pred_check_branch
      %347 = sbr.rel (0) target = $region21
    $region20: #{tpu_custom_call.1} parent=1 // pred_region
      %s349 = ssub.s32 4608, 4608
      %350 = vsyncadd [#allocation4], %s349
      %s351 = sshll.u32 [#allocation5], 4
      %s352 = int_to_ptr.vmem [resolvable:$true] %s351
      %357 = dma.vmem_to_hbm [thread:$0]  %s352, 4608, %s3, [#allocation4], 512, 512, 32
    $region21: #{tpu_custom_call.1} parent=1 // pred_fallthru
      _
    // Predicated region
    $region22: #{tpu_custom_call.1} parent=1 // pred_check
      _
    $region23: #{tpu_custom_call.1} parent=1 // pred_check_branch
      %359 = sbr.rel (0) target = $region25
    $region24: #{tpu_custom_call.1} parent=1 // pred_region
      %360 = dma.done [#allocation4], 4608
    $region25: #{tpu_custom_call.1} parent=1 // pred_fallthru
      _
    %361 = vsyncpa [#allocation3], 1
    %362 = vsyncpa [#allocation4], 1

</llo_original>
